<compile_context>
chip_gen: v5e
topology: v5e:2x2
jax: 0.10.0
libtpu: 0.0.40
codegen_flags: <defaults>
</compile_context>

<pallas_src>
import functools

import jax
import jax.numpy as jnp
from jax.experimental import pallas as pl
from jax.experimental.pallas import tpu as pltpu

_LANE = 128
_SUBLANE = 8


def _round_up(x, m):
    return ((x + m - 1) // m) * m


# --------------------------------------------------------------------------------------
# Kernel: fused 3-layer MLP for one batch tile.  All math in f32 (matches the module).
# --------------------------------------------------------------------------------------
def _qnetwork_kernel(x_ref, w1_ref, b1_ref, w2_ref, b2_ref, w3_ref, b3_ref, o_ref):
    x = x_ref[...]
    h1 = jnp.maximum(
        jnp.dot(x, w1_ref[...], preferred_element_type=jnp.float32) + b1_ref[...], 0.0)
    h2 = jnp.maximum(
        jnp.dot(h1, w2_ref[...], preferred_element_type=jnp.float32) + b2_ref[...], 0.0)
    out = jnp.dot(h2, w3_ref[...], preferred_element_type=jnp.float32) + b3_ref[...]
    o_ref[...] = out.astype(o_ref.dtype)


# --------------------------------------------------------------------------------------
# Tiling / VMEM policy helpers (all trace-time Python).
# --------------------------------------------------------------------------------------
def _vmem_limits():
    """Return (tile-sizing budget, scoped-VMEM limit), derived from real chip VMEM."""
    try:
        cap = int(pltpu.get_tpu_info().vmem_capacity_bytes)
    except Exception:  # query unavailable -> assume the smallest (v7x: 64 MiB per TC)
        cap = 64 << 20
    budget = min(cap // 2, 48 << 20)           # what the tiling policy may consume
    limit = min(cap - (16 << 20), 64 << 20)    # leave headroom for compiler scratch
    return budget, max(limit, 16 << 20)


def _vmem_estimate_bytes(tb, S, H1p, H2p, Ap):
    f32 = 4
    io = 2 * tb * S * f32 + 2 * tb * Ap * f32          # double-buffered x / out tiles
    wts = (S * H1p + H1p * H2p + H2p * Ap) * f32       # single-buffered weights
    bias = (H1p + H2p + Ap) * f32                      # single-buffered biases
    act = tb * (H1p + H2p + Ap) * f32                  # in-kernel f32 temporaries
    return io + wts + bias + act


def _default_batch_tile(B, S, H1p, H2p, Ap, budget):
    if B <= _SUBLANE:
        return B  # one full (legal) block is the only sensible tile
    tb = min(1024, _round_up(B, _SUBLANE))
    # v7x megacore: split the batch only when each TensorCore then gets >= 128 rows.
    # On single-TC v5e/v6e a forced split is pure per-step overhead, so we never do it.
    if B >= 256 and pl.cdiv(B, tb) < 2:
        tb = _round_up(pl.cdiv(B, 2), _SUBLANE)
    # Shrink (keeping multiples of 8) until the tile fits the VMEM budget.
    while tb > _SUBLANE and _vmem_estimate_bytes(tb, S, H1p, H2p, Ap) > budget:
        tb = max(_SUBLANE, (tb // 2) // _SUBLANE * _SUBLANE)
    return tb


def _replicated_spec(block_shape):
    """BlockSpec for an operand whose block never changes across grid steps.

    Single-buffer it (Pallas double-buffers by default) to halve its VMEM footprint."""
    index_map = lambda i: (0,) * len(block_shape)
    try:
        return pl.BlockSpec(block_shape, index_map, pipeline_mode=pl.Buffered(1))
    except (TypeError, AttributeError):  # older Pallas without pipeline_mode
        return pl.BlockSpec(block_shape, index_map)


# --------------------------------------------------------------------------------------
# Parameter preparation (run ONCE) + forward pass.
# --------------------------------------------------------------------------------------
def prepare_qnetwork_params(params, dtype=jnp.float32):
    """Pad feature dims up to 128 lanes and cast once (hoisted out of the forward).

    Padded weight rows/cols and biases are zero, so ReLU(0)=0 contributes nothing
    downstream -> math is unchanged.  Returns (padded_params, action_size)."""
    w1, b1, w2, b2, w3, b3 = (params[k] for k in ("w1", "b1", "w2", "b2", "w3", "b3"))
    S, H1 = w1.shape
    H2 = w2.shape[1]
    A = w3.shape[1]
    H1p, H2p, Ap = (_round_up(d, _LANE) for d in (H1, H2, A))

    def pad2(m, rows, cols):
        out = jnp.zeros((rows, cols), dtype)
        return out.at[: m.shape[0], : m.shape[1]].set(m.astype(dtype))

    padded = {
        "w1": pad2(w1, S, H1p),
        "b1": pad2(b1.reshape(1, -1), 1, H1p),
        "w2": pad2(w2, H1p, H2p),
        "b2": pad2(b2.reshape(1, -1), 1, H2p),
        "w3": pad2(w3, H2p, Ap),
        "b3": pad2(b3.reshape(1, -1), 1, Ap),
    }
    return padded, A


@functools.partial(jax.jit, static_argnames=("action_size", "batch_tile", "slice_output"))
def qnetwork_forward(x, padded_params, *, action_size, batch_tile=None, slice_output=True):
    """Forward pass of QNetwork via a single fused Pallas kernel.

    x: (B, state_size) float32.
    padded_params: output of prepare_qnetwork_params (lane-padded, cast once).
    """
    w1, b1, w2, b2, w3, b3 = (padded_params[k] for k in ("w1", "b1", "w2", "b2", "w3", "b3"))
    B, S = x.shape
    H1p, H2p, Ap = w1.shape[1], w2.shape[1], w3.shape[1]
    assert w1.shape[0] == S, "state_size mismatch between x and prepared params"

    budget, vmem_cap = _vmem_limits()
    if batch_tile is None:
        tb = _default_batch_tile(B, S, H1p, H2p, Ap, budget)
    else:
        if batch_tile < B and batch_tile % _SUBLANE != 0:
            raise ValueError("batch_tile must be a multiple of 8 (or cover the whole batch)")
        tb = min(batch_tile, _round_up(B, _SUBLANE))

    grid = (pl.cdiv(B, tb),)

    in_specs = [
        pl.BlockSpec((tb, S), lambda i: (i, 0)),  # x tile (streamed, double-buffered)
        _replicated_spec((S, H1p)),               # w1
        _replicated_spec((1, H1p)),               # b1
        _replicated_spec((H1p, H2p)),             # w2
        _replicated_spec((1, H2p)),               # b2
        _replicated_spec((H2p, Ap)),              # w3
        _replicated_spec((1, Ap)),                # b3
    ]
    out_spec = pl.BlockSpec((tb, Ap), lambda i: (i, 0))

    vmem_limit = int(min(max(2 * _vmem_estimate_bytes(tb, S, H1p, H2p, Ap) + (4 << 20),
                             16 << 20), vmem_cap))

    out_padded = pl.pallas_call(
        _qnetwork_kernel,
        out_shape=jax.ShapeDtypeStruct((B, Ap), jnp.float32),
        grid=grid,
        in_specs=in_specs,
        out_specs=out_spec,
        compiler_params=pltpu.CompilerParams(
            dimension_semantics=("parallel",),
            vmem_limit_bytes=vmem_limit,
        ),
    )(x.astype(jnp.float32), w1, b1, w2, b2, w3, b3)

    if slice_output:
        return out_padded[:, :action_size]
    return out_padded  # lane-padded (B, Ap); consumer can slice/argmax lazily


# --------------------------------------------------------------------------------------
# Init (torch.nn.Linear-style) and pure-JAX reference.
# --------------------------------------------------------------------------------------
def init_qnetwork_params(key, state_size, action_size, hidden_size1, hidden_size2):
    """U(-1/sqrt(fan_in), 1/sqrt(fan_in)) for weights and biases, stored (in, out)."""
    keys = jax.random.split(key, 6)

    def linear(kw, kb, fan_in, fan_out):
        bound = 1.0 / jnp.sqrt(jnp.float32(fan_in))
        w = jax.random.uniform(kw, (fan_in, fan_out), jnp.float32, -bound, bound)
        b = jax.random.uniform(kb, (1, fan_out), jnp.float32, -bound, bound)
        return w, b

    w1, b1 = linear(keys[0], keys[1], state_size, hidden_size1)
    w2, b2 = linear(keys[2], keys[3], hidden_size1, hidden_size2)
    w3, b3 = linear(keys[4], keys[5], hidden_size2, action_size)
    return {"w1": w1, "b1": b1, "w2": w2, "b2": b2, "w3": w3, "b3": b3}


def qnetwork_reference(x, params):
    """Pure-f32 JAX reference of the module's forward pass."""
    h1 = jnp.maximum(x @ params["w1"] + params["b1"], 0.0)
    h2 = jnp.maximum(h1 @ params["w2"] + params["b2"], 0.0)
    return h2 @ params["w3"] + params["b3"]


if __name__ == "__main__":
    # Small shapes consistent with the module: state vector in, Q-values per action out.
    batch = 16
    state_size = 16
    action_size = 8
    hidden_size1 = 32
    hidden_size2 = 32

    key = jax.random.PRNGKey(0)
    k_params, k_x = jax.random.split(key)

    params = init_qnetwork_params(k_params, state_size, action_size,
                                  hidden_size1, hidden_size2)
    x = jax.random.normal(k_x, (batch, state_size), jnp.float32)

    # Pad + cast ONCE (not per forward call).
    padded_params, a = prepare_qnetwork_params(params)

    out = qnetwork_forward(x, padded_params, action_size=a)
    out = jax.block_until_ready(out)
    assert out.shape == (batch, action_size)

    ref = qnetwork_reference(x, params)
    max_err = float(jnp.max(jnp.abs(out - ref)))
    assert jnp.allclose(out, ref, atol=2e-2, rtol=2e-2), (
        f"mismatch vs f32 reference (max abs err {max_err})")

    print("KERNEL_OK")
</pallas_src>

<mosaic_0001>
module attributes {stable_mosaic.version = 11 : i64} {
  func.func @_qnetwork_kernel(%arg0: i32, %arg1: memref<16x16xf32, #tpu.memory_space<vmem>>, %arg2: memref<16x128xf32, #tpu.memory_space<vmem>>, %arg3: memref<1x128xf32, #tpu.memory_space<vmem>>, %arg4: memref<128x128xf32, #tpu.memory_space<vmem>>, %arg5: memref<1x128xf32, #tpu.memory_space<vmem>>, %arg6: memref<128x128xf32, #tpu.memory_space<vmem>>, %arg7: memref<1x128xf32, #tpu.memory_space<vmem>>, %arg8: memref<16x128xf32, #tpu.memory_space<vmem>>) attributes {dimension_semantics = [#tpu.dimension_semantics<parallel>], iteration_bounds = array<i64: 1>, scalar_prefetch = 0 : i64, scratch_operands = 0 : i64, tpu.core_type = #tpu.core_type<tc>, window_params = [{transform_indices = @transform_0, window_bounds = array<i64: 16, 16>}, {pipeline_mode = #tpu.pipeline_mode<synchronous>, transform_indices = @transform_1, window_bounds = array<i64: 16, 128>}, {pipeline_mode = #tpu.pipeline_mode<synchronous>, transform_indices = @transform_2, window_bounds = array<i64: 1, 128>}, {pipeline_mode = #tpu.pipeline_mode<synchronous>, transform_indices = @transform_3, window_bounds = array<i64: 128, 128>}, {pipeline_mode = #tpu.pipeline_mode<synchronous>, transform_indices = @transform_4, window_bounds = array<i64: 1, 128>}, {pipeline_mode = #tpu.pipeline_mode<synchronous>, transform_indices = @transform_5, window_bounds = array<i64: 128, 128>}, {pipeline_mode = #tpu.pipeline_mode<synchronous>, transform_indices = @transform_6, window_bounds = array<i64: 1, 128>}, {transform_indices = @transform_7, window_bounds = array<i64: 16, 128>}]} {
    %c0 = arith.constant 0 : index
    %c0_0 = arith.constant 0 : index
    %0 = vector.load %arg1[%c0, %c0_0] : memref<16x16xf32, #tpu.memory_space<vmem>>, vector<16x16xf32>
    %c0_1 = arith.constant 0 : index
    %c0_2 = arith.constant 0 : index
    %1 = vector.load %arg2[%c0_1, %c0_2] : memref<16x128xf32, #tpu.memory_space<vmem>>, vector<16x128xf32>
    %cst = arith.constant dense<0.000000e+00> : vector<16x128xf32>
    %2 = tpu.matmul %0, %1, %cst {dimension_numbers = #tpu.dot_dimension_numbers<[1], [0], [0], [1], [0, 0, 1, 1], [], []>} : vector<16x16xf32>, vector<16x128xf32>, vector<16x128xf32> -> vector<16x128xf32>
    %c0_3 = arith.constant 0 : index
    %c0_4 = arith.constant 0 : index
    %3 = vector.load %arg3[%c0_3, %c0_4] : memref<1x128xf32, #tpu.memory_space<vmem>>, vector<1x128xf32>
    %4 = vector.broadcast %3 : vector<1x128xf32> to vector<16x128xf32>
    %5 = arith.addf %2, %4 : vector<16x128xf32>
    %cst_5 = arith.constant 0.000000e+00 : f32
    %6 = vector.broadcast %cst_5 : f32 to vector<16x128xf32>
    %7 = arith.maximumf %5, %6 : vector<16x128xf32>
    %c0_6 = arith.constant 0 : index
    %c0_7 = arith.constant 0 : index
    %8 = vector.load %arg4[%c0_6, %c0_7] : memref<128x128xf32, #tpu.memory_space<vmem>>, vector<128x128xf32>
    %cst_8 = arith.constant dense<0.000000e+00> : vector<16x128xf32>
    %9 = tpu.matmul %7, %8, %cst_8 {dimension_numbers = #tpu.dot_dimension_numbers<[1], [0], [0], [1], [0, 0, 1, 1], [], []>} : vector<16x128xf32>, vector<128x128xf32>, vector<16x128xf32> -> vector<16x128xf32>
    %c0_9 = arith.constant 0 : index
    %c0_10 = arith.constant 0 : index
    %10 = vector.load %arg5[%c0_9, %c0_10] : memref<1x128xf32, #tpu.memory_space<vmem>>, vector<1x128xf32>
    %11 = vector.broadcast %10 : vector<1x128xf32> to vector<16x128xf32>
    %12 = arith.addf %9, %11 : vector<16x128xf32>
    %cst_11 = arith.constant 0.000000e+00 : f32
    %13 = vector.broadcast %cst_11 : f32 to vector<16x128xf32>
    %14 = arith.maximumf %12, %13 : vector<16x128xf32>
    %c0_12 = arith.constant 0 : index
    %c0_13 = arith.constant 0 : index
    %15 = vector.load %arg6[%c0_12, %c0_13] : memref<128x128xf32, #tpu.memory_space<vmem>>, vector<128x128xf32>
    %cst_14 = arith.constant dense<0.000000e+00> : vector<16x128xf32>
    %16 = tpu.matmul %14, %15, %cst_14 {dimension_numbers = #tpu.dot_dimension_numbers<[1], [0], [0], [1], [0, 0, 1, 1], [], []>} : vector<16x128xf32>, vector<128x128xf32>, vector<16x128xf32> -> vector<16x128xf32>
    %c0_15 = arith.constant 0 : index
    %c0_16 = arith.constant 0 : index
    %17 = vector.load %arg7[%c0_15, %c0_16] : memref<1x128xf32, #tpu.memory_space<vmem>>, vector<1x128xf32>
    %18 = vector.broadcast %17 : vector<1x128xf32> to vector<16x128xf32>
    %19 = arith.addf %16, %18 : vector<16x128xf32>
    %c0_17 = arith.constant 0 : index
    %c0_18 = arith.constant 0 : index
    %20 = vector.load %arg8[%c0_17, %c0_18] : memref<16x128xf32, #tpu.memory_space<vmem>>, vector<16x128xf32>
    tpu.vector_store %arg8[%c0_17, %c0_18], %19 {strides = array<i32>} : memref<16x128xf32, #tpu.memory_space<vmem>>, vector<16x128xf32>,
    return
  }
  func.func @transform_0(%arg0: i32) -> (i32, i32) {
    %c0_i32 = arith.constant 0 : i32
    %c0_i32_0 = arith.constant 0 : i32
    return %arg0, %c0_i32 : i32, i32
  }
  func.func @transform_1(%arg0: i32) -> (i32, i32) {
    %c0_i32 = arith.constant 0 : i32
    %c0_i32_0 = arith.constant 0 : i32
    %c0_i32_1 = arith.constant 0 : i32
    return %c0_i32, %c0_i32_0 : i32, i32
  }
  func.func @transform_2(%arg0: i32) -> (i32, i32) {
    %c0_i32 = arith.constant 0 : i32
    %c0_i32_0 = arith.constant 0 : i32
    %c0_i32_1 = arith.constant 0 : i32
    return %c0_i32, %c0_i32_0 : i32, i32
  }
  func.func @transform_3(%arg0: i32) -> (i32, i32) {
    %c0_i32 = arith.constant 0 : i32
    %c0_i32_0 = arith.constant 0 : i32
    %c0_i32_1 = arith.constant 0 : i32
    return %c0_i32, %c0_i32_0 : i32, i32
  }
  func.func @transform_4(%arg0: i32) -> (i32, i32) {
    %c0_i32 = arith.constant 0 : i32
    %c0_i32_0 = arith.constant 0 : i32
    %c0_i32_1 = arith.constant 0 : i32
    return %c0_i32, %c0_i32_0 : i32, i32
  }
  func.func @transform_5(%arg0: i32) -> (i32, i32) {
    %c0_i32 = arith.constant 0 : i32
    %c0_i32_0 = arith.constant 0 : i32
    %c0_i32_1 = arith.constant 0 : i32
    return %c0_i32, %c0_i32_0 : i32, i32
  }
  func.func @transform_6(%arg0: i32) -> (i32, i32) {
    %c0_i32 = arith.constant 0 : i32
    %c0_i32_0 = arith.constant 0 : i32
    %c0_i32_1 = arith.constant 0 : i32
    return %c0_i32, %c0_i32_0 : i32, i32
  }
  func.func @transform_7(%arg0: i32) -> (i32, i32) {
    %c0_i32 = arith.constant 0 : i32
    %c0_i32_0 = arith.constant 0 : i32
    return %arg0, %c0_i32 : i32, i32
  }
}

</mosaic_0001>

<llo_original>
// kernel: qnetwork_forward.1
$region0: #{qnetwork_forward.1}
  #allocation0 [shape = 'u32[]', space=smem, size = 0x4, offset = 0x4, fixed_abs, tag = 'smem constant byte address 0x4 - core index']
  #allocation1 [shape = 'u32[72,128]{1,0:T(1,128)}', space=vmem, size = 0x9000, scoped, tag = 'internal scratch']
  %s0 = inlined_call_operand.hbm [shape: f32[16,16], index: 0, kind: input, shape index: {}]
  %s1 = inlined_call_operand.hbm [shape: f32[16,128], index: 1, kind: input, shape index: {}]
  %s2 = inlined_call_operand.hbm [shape: f32[1,128], index: 2, kind: input, shape index: {}]
  %s3 = inlined_call_operand.hbm [shape: f32[128,128], index: 3, kind: input, shape index: {}]
  %s4 = inlined_call_operand.vmem [shape: f32[1,128], index: 4, kind: input, shape index: {}]
  %s5 = inlined_call_operand.hbm [shape: f32[128,128], index: 5, kind: input, shape index: {}]
  %s6 = inlined_call_operand.vmem [shape: f32[1,128], index: 6, kind: input, shape index: {}]
  %s7 = inlined_call_operand.vmem [shape: f32[16,128], index: 7, kind: output, shape index: {}]
  %s8 = sld [smem:[#allocation0]]
  $region58: #{qnetwork_forward.1} parent=0
    _
  %s10 = ssub.s32 1, %s8
  %s11 = scalar_select 0, %s10, %s8
  $region1: #{qnetwork_forward.1} parent=0
    #allocation2 [shape = 'u8[8192]{0}', space=vmem, size = 0x2000, scoped, tag = 'input window, operand 0, single buffered']
    #allocation3 [shape = 's32[1]{0}', space=sflag, size = 0x4, scoped, tag = 'scoped memory for qnetwork_forward.1']
    #allocation4 [shape = 'u8[8192]{0}', space=vmem, size = 0x2000, scoped, tag = 'input window, operand 1, single buffered']
    #allocation5 [shape = 's32[1]{0}', space=sflag, size = 0x4, scoped, tag = 'scoped memory for qnetwork_forward.1']
    #allocation6 [shape = 'u8[512]{0}', space=vmem, size = 0x400, scoped, tag = 'input window, operand 2, single buffered']
    #allocation7 [shape = 'u8[65536]{0}', space=vmem, size = 0x10000, scoped, tag = 'input window, operand 3, single buffered']
    #allocation8 [shape = 's32[1]{0}', space=sflag, size = 0x4, scoped, tag = 'scoped memory for qnetwork_forward.1']
    #allocation9 [shape = 'u8[65536]{0}', space=vmem, size = 0x10000, scoped, tag = 'input window, operand 5, single buffered']
    %12 = vsyncpa [#allocation3], 0
    %13 = vsyncpa [#allocation5], 0
    %14 = vsyncpa [#allocation8], 0
    // Predicated region
    $region2: #{qnetwork_forward.1} parent=1 // pred_check
      _
    $region3: #{qnetwork_forward.1} parent=1 // pred_check_branch
      %16 = sbr.rel (0) target = $region5
    $region4: #{qnetwork_forward.1} parent=1 // pred_region
      %18 = vsyncadd [#allocation3], 0
      %s19 = sshll.u32 %s0, 4
      %s20 = int_to_ptr.hbm [resolvable:$true] %s19
      %s21 = sshll.u32 [#allocation2], 4
      %s22 = int_to_ptr.vmem [resolvable:$true] %s21
      %27 = dma.hbm_to_vmem [thread:$0]  %s20, 256, %s22, [#allocation3], 128, 128, 8
    $region5: #{qnetwork_forward.1} parent=1 // pred_fallthru
      _
    // Predicated region
    $region6: #{qnetwork_forward.1} parent=1 // pred_check
      _
    $region7: #{qnetwork_forward.1} parent=1 // pred_check_branch
      %29 = sbr.rel (0) target = $region9
    $region8: #{qnetwork_forward.1} parent=1 // pred_region
      %31 = vsyncadd [#allocation5], 0
      %s32 = sshll.u32 %s1, 4
      %s33 = int_to_ptr.hbm [resolvable:$true] %s32
      %s34 = sshll.u32 [#allocation4], 4
      %s35 = int_to_ptr.vmem [resolvable:$true] %s34
      %40 = dma.hbm_to_vmem [thread:$0]  %s33, 256, %s35, [#allocation5], 128, 128, 8
    $region9: #{qnetwork_forward.1} parent=1 // pred_fallthru
      _
    // Predicated region
    $region10: #{qnetwork_forward.1} parent=1 // pred_check
      _
    $region11: #{qnetwork_forward.1} parent=1 // pred_check_branch
      %42 = sbr.rel (0) target = $region13
    $region12: #{qnetwork_forward.1} parent=1 // pred_region
      %44 = vsyncadd [#allocation5], 0
      %s46 = sshll.u32 %s2, 4
      %s47 = int_to_ptr.hbm [resolvable:$true] %s46
      %s48 = sshll.u32 [#allocation6], 4
      %s49 = int_to_ptr.vmem [resolvable:$true] %s48
      %51 = dma.hbm_to_vmem [thread:$0]  %s47, 16, %s49, [#allocation5]
    $region13: #{qnetwork_forward.1} parent=1 // pred_fallthru
      _
    // Predicated region
    $region14: #{qnetwork_forward.1} parent=1 // pred_check
      _
    $region15: #{qnetwork_forward.1} parent=1 // pred_check_branch
      %53 = sbr.rel (0) target = $region17
    $region16: #{qnetwork_forward.1} parent=1 // pred_region
      %55 = vsyncadd [#allocation8], 0
      %s56 = sshll.u32 %s3, 4
      %s57 = int_to_ptr.hbm [resolvable:$true] %s56
      %s58 = sshll.u32 [#allocation7], 4
      %s59 = int_to_ptr.vmem [resolvable:$true] %s58
      %64 = dma.hbm_to_vmem [thread:$0]  %s57, 2048, %s59, [#allocation8], 128, 128, 8
    $region17: #{qnetwork_forward.1} parent=1 // pred_fallthru
      _
    // Predicated region
    $region18: #{qnetwork_forward.1} parent=1 // pred_check
      _
    $region19: #{qnetwork_forward.1} parent=1 // pred_check_branch
      %66 = sbr.rel (0) target = $region21
    $region20: #{qnetwork_forward.1} parent=1 // pred_region
      _
    $region21: #{qnetwork_forward.1} parent=1 // pred_fallthru
      _
    // Predicated region
    $region22: #{qnetwork_forward.1} parent=1 // pred_check
      _
    $region23: #{qnetwork_forward.1} parent=1 // pred_check_branch
      %68 = sbr.rel (0) target = $region25
    $region24: #{qnetwork_forward.1} parent=1 // pred_region
      %70 = vsyncadd [#allocation8], 0
      %s71 = sshll.u32 %s5, 4
      %s72 = int_to_ptr.hbm [resolvable:$true] %s71
      %s73 = sshll.u32 [#allocation9], 4
      %s74 = int_to_ptr.vmem [resolvable:$true] %s73
      %79 = dma.hbm_to_vmem [thread:$0]  %s72, 2048, %s74, [#allocation8], 128, 128, 8
    $region25: #{qnetwork_forward.1} parent=1 // pred_fallthru
      _
    // Predicated region
    $region26: #{qnetwork_forward.1} parent=1 // pred_check
      _
    $region27: #{qnetwork_forward.1} parent=1 // pred_check_branch
      %81 = sbr.rel (0) target = $region29
    $region28: #{qnetwork_forward.1} parent=1 // pred_region
      _
    $region29: #{qnetwork_forward.1} parent=1 // pred_fallthru
      _
    // Predicated region
    $region30: #{qnetwork_forward.1} parent=1 // pred_check
      _
    $region31: #{qnetwork_forward.1} parent=1 // pred_check_branch
      %83 = sbr.rel (0) target = $region33
    $region32: #{qnetwork_forward.1} parent=1 // pred_region
      %85 = dma.done [#allocation3], 256
    $region33: #{qnetwork_forward.1} parent=1 // pred_fallthru
      _
    // Predicated region
    $region34: #{qnetwork_forward.1} parent=1 // pred_check
      _
    $region35: #{qnetwork_forward.1} parent=1 // pred_check_branch
      %87 = sbr.rel (0) target = $region37
    $region36: #{qnetwork_forward.1} parent=1 // pred_region
      %89 = dma.done [#allocation5], 256
    $region37: #{qnetwork_forward.1} parent=1 // pred_fallthru
      _
    // Predicated region
    $region38: #{qnetwork_forward.1} parent=1 // pred_check
      _
    $region39: #{qnetwork_forward.1} parent=1 // pred_check_branch
      %91 = sbr.rel (0) target = $region41
    $region40: #{qnetwork_forward.1} parent=1 // pred_region
      %93 = dma.done [#allocation5], 16
    $region41: #{qnetwork_forward.1} parent=1 // pred_fallthru
      _
    // Predicated region
    $region42: #{qnetwork_forward.1} parent=1 // pred_check
      _
    $region43: #{qnetwork_forward.1} parent=1 // pred_check_branch
      %95 = sbr.rel (0) target = $region45
    $region44: #{qnetwork_forward.1} parent=1 // pred_region
      %97 = dma.done [#allocation8], 2048
    $region45: #{qnetwork_forward.1} parent=1 // pred_fallthru
      _
    // Predicated region
    $region46: #{qnetwork_forward.1} parent=1 // pred_check
      _
    $region47: #{qnetwork_forward.1} parent=1 // pred_check_branch
      %99 = sbr.rel (0) target = $region49
    $region48: #{qnetwork_forward.1} parent=1 // pred_region
      %101 = dma.done [#allocation8], 2048
    $region49: #{qnetwork_forward.1} parent=1 // pred_fallthru
      _
    %v102 = vld [vmem:[#allocation2] sm:$0xff]
    %v103 = vld [vmem:[#allocation2 + $0x8] sm:$0xff]
    %v104 = vld [vmem:[#allocation4] sm:$0xff]
    %v105 = vld [vmem:[#allocation4 + $0x8] sm:$0xff]
    %v106 = vld [vmem:[#allocation6] sm:$0x1]
    %v108 = vperm.slane %v106, 0
    %vm110 = vcmask 130048
    %v112 = vsel %vm110, %v102, 0
    %v115 = vsel %vm110, %v103, 0
    %117 = vmatpush.msra.mxu0 0.0
    %118 = vmatpush.msra.mxu0 0.0
    %119 = vmatpush.msra.mxu0 0.0
    %120 = vmatpush.msra.mxu0 0.0
    %121 = vmatpush.msra.mxu0 0.0
    %122 = vmatpush.msra.mxu0 0.0
    %123 = vmatpush.msra.mxu0 0.0
    %124 = vmatpush.msra.mxu0 0.0
    %125 = vmatpush.msra.mxu0 0.0
    %126 = vmatpush.msra.mxu0 0.0
    %127 = vmatpush.msra.mxu0 0.0
    %128 = vmatpush.msra.mxu0 0.0
    %129 = vmatpush.msra.mxu0 0.0
    %130 = vmatpush.msra.mxu0 0.0
    %131 = vmatpush.msra.mxu0 %v105
    %132 = vmatpush.msra.mxu0 %v104
    %133 = vmatmul.f32.gmra.mxu0 %v112
    %v134 = vpop.f32.mrf.mxu0
    %v135 = vadd.f32 %v108, %v134
    %136 = vmatmul.f32.gmra.mxu0 %v115
    %v137 = vpop.f32.mrf.mxu0
    %v138 = vadd.f32 %v108, %v137
    %139 = vdwg.mxu0
    %v140 = vmax.f32 %v135, 0.0
    %v141 = vmax.f32 %v138, 0.0
    %v142 = vld [vmem:[#allocation7] sm:$0xff]
    %v143 = vld [vmem:[#allocation7 + $0x8] sm:$0xff]
    %v144 = vld [vmem:[#allocation7 + $0x10] sm:$0xff]
    %v145 = vld [vmem:[#allocation7 + $0x18] sm:$0xff]
    %v146 = vld [vmem:[#allocation7 + $0x20] sm:$0xff]
    %v147 = vld [vmem:[#allocation7 + $0x28] sm:$0xff]
    %v148 = vld [vmem:[#allocation7 + $0x30] sm:$0xff]
    %v149 = vld [vmem:[#allocation7 + $0x38] sm:$0xff]
    %v150 = vld [vmem:[#allocation7 + $0x40] sm:$0xff]
    %v151 = vld [vmem:[#allocation7 + $0x48] sm:$0xff]
    %v152 = vld [vmem:[#allocation7 + $0x50] sm:$0xff]
    %v153 = vld [vmem:[#allocation7 + $0x58] sm:$0xff]
    %v154 = vld [vmem:[#allocation7 + $0x60] sm:$0xff]
    %v155 = vld [vmem:[#allocation7 + $0x68] sm:$0xff]
    %v156 = vld [vmem:[#allocation7 + $0x70] sm:$0xff]
    %v157 = vld [vmem:[#allocation7 + $0x78] sm:$0xff]
    %v158 = vld [vmem:[%s4] sm:$0x1]
    %v160 = vperm.slane %v158, 0
    %162 = vmatpush.msra.mxu0 %v157
    %163 = vmatpush.msra.mxu0 %v156
    %164 = vmatpush.msra.mxu0 %v155
    %165 = vmatpush.msra.mxu0 %v154
    %166 = vmatpush.msra.mxu0 %v153
    %167 = vmatpush.msra.mxu0 %v152
    %168 = vmatpush.msra.mxu0 %v151
    %169 = vmatpush.msra.mxu0 %v150
    %170 = vmatpush.msra.mxu0 %v149
    %171 = vmatpush.msra.mxu0 %v148
    %172 = vmatpush.msra.mxu0 %v147
    %173 = vmatpush.msra.mxu0 %v146
    %174 = vmatpush.msra.mxu0 %v145
    %175 = vmatpush.msra.mxu0 %v144
    %176 = vmatpush.msra.mxu0 %v143
    %177 = vmatpush.msra.mxu0 %v142
    %178 = vmatmul.f32.gmra.mxu0 %v140
    %v179 = vpop.f32.mrf.mxu0
    %v180 = vadd.f32 %v160, %v179
    %181 = vmatmul.f32.gmra.mxu0 %v141
    %v182 = vpop.f32.mrf.mxu0
    %v183 = vadd.f32 %v160, %v182
    %184 = vdwg.mxu0
    %v185 = vmax.f32 %v180, 0.0
    %v186 = vmax.f32 %v183, 0.0
    %v187 = vld [vmem:[#allocation9] sm:$0xff]
    %v188 = vld [vmem:[#allocation9 + $0x8] sm:$0xff]
    %v189 = vld [vmem:[#allocation9 + $0x10] sm:$0xff]
    %v190 = vld [vmem:[#allocation9 + $0x18] sm:$0xff]
    %v191 = vld [vmem:[#allocation9 + $0x20] sm:$0xff]
    %v192 = vld [vmem:[#allocation9 + $0x28] sm:$0xff]
    %v193 = vld [vmem:[#allocation9 + $0x30] sm:$0xff]
    %v194 = vld [vmem:[#allocation9 + $0x38] sm:$0xff]
    %v195 = vld [vmem:[#allocation9 + $0x40] sm:$0xff]
    %v196 = vld [vmem:[#allocation9 + $0x48] sm:$0xff]
    %v197 = vld [vmem:[#allocation9 + $0x50] sm:$0xff]
    %v198 = vld [vmem:[#allocation9 + $0x58] sm:$0xff]
    %v199 = vld [vmem:[#allocation9 + $0x60] sm:$0xff]
    %v200 = vld [vmem:[#allocation9 + $0x68] sm:$0xff]
    %v201 = vld [vmem:[#allocation9 + $0x70] sm:$0xff]
    %v202 = vld [vmem:[#allocation9 + $0x78] sm:$0xff]
    %v203 = vld [vmem:[%s6] sm:$0x1]
    %v205 = vperm.slane %v203, 0
    %207 = vmatpush.msra.mxu0 %v202
    %208 = vmatpush.msra.mxu0 %v201
    %209 = vmatpush.msra.mxu0 %v200
    %210 = vmatpush.msra.mxu0 %v199
    %211 = vmatpush.msra.mxu0 %v198
    %212 = vmatpush.msra.mxu0 %v197
    %213 = vmatpush.msra.mxu0 %v196
    %214 = vmatpush.msra.mxu0 %v195
    %215 = vmatpush.msra.mxu0 %v194
    %216 = vmatpush.msra.mxu0 %v193
    %217 = vmatpush.msra.mxu0 %v192
    %218 = vmatpush.msra.mxu0 %v191
    %219 = vmatpush.msra.mxu0 %v190
    %220 = vmatpush.msra.mxu0 %v189
    %221 = vmatpush.msra.mxu0 %v188
    %222 = vmatpush.msra.mxu0 %v187
    %223 = vmatmul.f32.gmra.mxu0 %v185
    %v224 = vpop.f32.mrf.mxu0
    %v225 = vadd.f32 %v205, %v224
    %226 = vmatmul.f32.gmra.mxu0 %v186
    %v227 = vpop.f32.mrf.mxu0
    %v228 = vadd.f32 %v205, %v227
    %229 = vdwg.mxu0
    %230 = vst [vmem:[%s7] sm:$0xff] %v225
    %231 = vst [vmem:[%s7 + $0x8] sm:$0xff] %v228
    // Predicated region
    $region50: #{qnetwork_forward.1} parent=1 // pred_check
      _
    $region51: #{qnetwork_forward.1} parent=1 // pred_check_branch
      %233 = sbr.rel (0) target = $region53
    $region52: #{qnetwork_forward.1} parent=1 // pred_region
      _
    $region53: #{qnetwork_forward.1} parent=1 // pred_fallthru
      _
    // Predicated region
    $region54: #{qnetwork_forward.1} parent=1 // pred_check
      _
    $region55: #{qnetwork_forward.1} parent=1 // pred_check_branch
      %235 = sbr.rel (0) target = $region57
    $region56: #{qnetwork_forward.1} parent=1 // pred_region
      _
    $region57: #{qnetwork_forward.1} parent=1 // pred_fallthru
      _
    %236 = vsyncpa [#allocation3], 1
    %237 = vsyncpa [#allocation5], 1
    %238 = vsyncpa [#allocation8], 1

</llo_original>
